<compile_context>
chip_gen: v7x
topology: tpu7x:2x2x1
jax: 0.10.0
libtpu: 0.0.40
codegen_flags: <defaults>
</compile_context>

<pallas_src>
import math

import jax
import jax.numpy as jnp
from jax.experimental import pallas as pl
from jax.experimental.pallas import tpu as pltpu

_MIB = 1 << 20


# ---------------------------------------------------------------------------
# pe buffer construction -- identical math to the PyTorch __init__ (robust to odd D).
# Stored once at the model dtype so no per-call cast pass is needed.
# ---------------------------------------------------------------------------
def make_positional_encodings(d_model: int, max_len: int = 1000,
                              dtype=jnp.float32) -> jnp.ndarray:
    pos = jnp.arange(max_len, dtype=jnp.float32)[:, None]                 # (max_len, 1)
    div = jnp.exp(jnp.arange(0, d_model, 2, dtype=jnp.float32)
                  * (-jnp.log(jnp.float32(10000.0)) / d_model))           # (ceil(D/2),)
    sin = jnp.sin(pos * div)
    cos = jnp.cos(pos * div)
    pe = jnp.zeros((max_len, d_model), dtype=jnp.float32)
    pe = pe.at[:, 0::2].set(sin)
    pe = pe.at[:, 1::2].set(cos[:, : d_model // 2])
    return pe[None, :, :].astype(dtype)                                   # (1, max_len, D)


# ---------------------------------------------------------------------------
# Kernel body (shared by both variants).  Refs are either 2-D (ts, D) tiles
# (sequence-tiled, batch squeezed) or 3-D (tb, S, D) + (1, S, D) (batch-blocked,
# pe broadcast over the leading dim).  The cast fuses into the add on the VPU.
# ---------------------------------------------------------------------------
def _pe_add_kernel(x_ref, pe_ref, o_ref):
    o_ref[...] = x_ref[...] + pe_ref[...].astype(o_ref.dtype)


# ---------------------------------------------------------------------------
# Helpers
# ---------------------------------------------------------------------------
def _round_up(x: int, m: int) -> int:
    return ((x + m - 1) // m) * m


def _vmem_budget_bytes() -> int:
    """Scoped-VMEM budget: 3/4 of physical per-core VMEM, capped at 64 MiB."""
    try:
        phys = int(pltpu.get_tpu_info().vmem_capacity_bytes)
    except Exception:
        phys = 64 * _MIB        # conservative: v7x per-TensorCore physical VMEM
    return int(min(phys * 3 // 4, 64 * _MIB))


def _maybe_single_buffered_spec(block_shape, index_map, single_buffer: bool):
    """pe BlockSpec, single-buffered when the second pipeline buffer is dead VMEM."""
    if single_buffer:
        try:
            return pl.BlockSpec(block_shape, index_map, pipeline_mode=pl.Buffered(1))
        except TypeError:
            pass                 # older jax: BlockSpec has no pipeline_mode kwarg
    return pl.BlockSpec(block_shape, index_map)


def _fold_lane_dense(x: jnp.ndarray, pe: jnp.ndarray):
    """Fold groups of consecutive sequence positions into the last dim so it is a
    multiple of 128 (unmasked vst), without materializing a pe slice."""
    B, S, D = x.shape
    max_len = pe.shape[1]
    if D % 128 == 0:
        return x, pe
    g = math.lcm(D, 128) // D
    if g > 1 and S % g == 0:
        x_f = x.reshape(B, S // g, D * g)
        if max_len % g == 0:
            pe_f = pe.reshape(1, max_len // g, D * g)          # full buffer re-folded
        else:
            pe_f = pe[:, :S, :].reshape(1, S // g, D * g)      # rare small fallback
        return x_f, pe_f
    # TODO(synk): D % 128 != 0 and S % g != 0 keeps lane-sparse (masked) output stores;
    # pad D to the next multiple of 128 in the wrapper if such a shape ever runs hot.
    return x, pe


# ---------------------------------------------------------------------------
# Pallas call construction
# ---------------------------------------------------------------------------
def _pe_add_pallas(x3: jnp.ndarray, pe3: jnp.ndarray, *,
                   pe_single_buffer: bool = True) -> jnp.ndarray:
    B, S, D = x3.shape
    itemsize = x3.dtype.itemsize
    pe_itemsize = pe3.dtype.itemsize
    sublane = {4: 8, 2: 16, 1: 32}.get(itemsize, 8)

    budget = _vmem_budget_bytes()
    # Budget for 6 tile-sized buffers (x/out double-buffered, pe conservatively x2)
    # plus headroom; cap tiles at 8 MiB -- past the roofline plateau there is no gain.
    tile_target = int(min(8 * _MIB, max(2 * _MIB, (budget - 4 * _MIB) // 6)))

    S_blk = _round_up(S, sublane)
    slab_bytes = S_blk * D * itemsize          # one batch element, sublane-rounded

    if slab_bytes < tile_target:
        # --- batch-blocked variant: several batch elements per grid step -----------
        tb = max(1, min(B, tile_target // max(slab_bytes, 1)))
        n_steps = pl.cdiv(B, tb)
        if B >= 2 and n_steps < 2:
            tb = (B + 1) // 2                  # expose >=2 parallel steps (v7x megacore)
            n_steps = pl.cdiv(B, tb)
        grid = (n_steps,)
        x_spec = pl.BlockSpec((tb, S_blk, D), lambda i: (i, 0, 0))
        pe_spec = _maybe_single_buffered_spec((1, S_blk, D), lambda i: (0, 0, 0),
                                              pe_single_buffer)   # constant index
        out_spec = pl.BlockSpec((tb, S_blk, D), lambda i: (i, 0, 0))
        x_tile = tb * S_blk * D * itemsize
        pe_tile = S_blk * D * pe_itemsize
        dim_sem = ("parallel",)
    else:
        # --- sequence-tiled variant: seq tiles OUTER, batch INNER (pe DMA reuse) ---
        ts = (tile_target // max(D * itemsize, 1)) // sublane * sublane
        ts = max(ts, sublane)
        ts = min(ts, _round_up(S, sublane))
        n_seq = pl.cdiv(S, ts)
        if B == 1 and n_seq < 2 and S > sublane:
            ts = max(sublane, _round_up(pl.cdiv(S, 2), sublane))  # 2 steps for megacore
            n_seq = pl.cdiv(S, ts)
        grid = (n_seq, B)
        # Single-buffered pe only pays off when the batch-inner loop amortizes the
        # refetch stall that occurs each time the seq-tile index changes.
        pe_sb = pe_single_buffer and B > 1
        x_spec = pl.BlockSpec((None, ts, D), lambda s, b: (b, s, 0))
        pe_spec = _maybe_single_buffered_spec((None, ts, D), lambda s, b: (0, s, 0), pe_sb)
        out_spec = pl.BlockSpec((None, ts, D), lambda s, b: (b, s, 0))
        x_tile = ts * D * itemsize
        pe_tile = ts * D * pe_itemsize
        dim_sem = ("parallel", "parallel")

    # Re-derive the scoped VMEM limit from the actual tiles (conservative buffer counts).
    needed = 2 * (2 * x_tile + pe_tile) + 2 * _MIB
    vmem_limit = int(min(budget, max(needed, 16 * _MIB)))

    return pl.pallas_call(
        _pe_add_kernel,
        out_shape=jax.ShapeDtypeStruct((B, S, D), x3.dtype),
        grid_spec=pltpu.PrefetchScalarGridSpec(
            num_scalar_prefetch=0,
            grid=grid,
            in_specs=[x_spec, pe_spec],
            out_specs=out_spec,
        ),
        compiler_params=pltpu.CompilerParams(
            dimension_semantics=dim_sem,
            vmem_limit_bytes=vmem_limit,
        ),
    )(x3, pe3)


# ---------------------------------------------------------------------------
# Forward wrapper -- same semantics as PositionalEncoding.forward
# ---------------------------------------------------------------------------
def positional_encoding_forward(x: jnp.ndarray, pe: jnp.ndarray, *,
                                force_pallas: bool = False,
                                min_pallas_elements: int = 1 << 16) -> jnp.ndarray:
    """x: (B, S, D), pe: (1, max_len, D) -> (B, S, D)."""
    B, S, D = x.shape
    assert pe.shape[0] == 1 and pe.shape[2] == D and pe.shape[1] >= S

    if not force_pallas and x.size < min_pallas_elements:
        # Tiny problems: kernel-launch + pipeline prologue dominates; let XLA fuse it.
        return x + pe[:, :S, :].astype(x.dtype)

    x3, pe3 = _fold_lane_dense(x, pe)
    try:
        out = _pe_add_pallas(x3, pe3, pe_single_buffer=True)
    except Exception:
        # jax version without Buffered(1) support on BlockSpec -> plain double-buffering.
        out = _pe_add_pallas(x3, pe3, pe_single_buffer=False)
    return out.reshape(B, S, D)


if __name__ == "__main__":
    B, S, D = 2, 8, 32
    max_len = 64

    key = jax.random.PRNGKey(0)
    x = jax.random.normal(key, (B, S, D), dtype=jnp.float32)

    pe = make_positional_encodings(D, max_len, dtype=x.dtype)

    # force_pallas=True so the Pallas kernel itself runs even at these demo shapes.
    out = positional_encoding_forward(x, pe, force_pallas=True)
    out = jax.block_until_ready(out)

    # Pure-JAX reference check of the forward semantics.
    ref = x + pe[:, :S, :]
    assert out.shape == (B, S, D)
    assert jnp.allclose(out, ref, atol=1e-6, rtol=1e-6)

    print("KERNEL_OK")
</pallas_src>

<mosaic_0001>
module attributes {stable_mosaic.version = 11 : i64} {
  func.func @_pe_add_kernel(%arg0: i32, %arg1: memref<1x8x128xf32, #tpu.memory_space<vmem>>, %arg2: memref<1x8x128xf32, #tpu.memory_space<vmem>>, %arg3: memref<1x8x128xf32, #tpu.memory_space<vmem>>) attributes {dimension_semantics = [#tpu.dimension_semantics<parallel>], iteration_bounds = array<i64: 2>, scalar_prefetch = 0 : i64, scratch_operands = 0 : i64, tpu.core_type = #tpu.core_type<tc>, window_params = [{transform_indices = @transform_0, window_bounds = array<i64: 1, 8, 128>}, {pipeline_mode = #tpu.pipeline_mode<synchronous>, transform_indices = @transform_1, window_bounds = array<i64: 1, 8, 128>}, {transform_indices = @transform_2, window_bounds = array<i64: 1, 8, 128>}]} {
    %c0 = arith.constant 0 : index
    %c0_0 = arith.constant 0 : index
    %c0_1 = arith.constant 0 : index
    %0 = vector.load %arg1[%c0, %c0_0, %c0_1] : memref<1x8x128xf32, #tpu.memory_space<vmem>>, vector<1x8x128xf32>
    %c0_2 = arith.constant 0 : index
    %c0_3 = arith.constant 0 : index
    %c0_4 = arith.constant 0 : index
    %1 = vector.load %arg2[%c0_2, %c0_3, %c0_4] : memref<1x8x128xf32, #tpu.memory_space<vmem>>, vector<1x8x128xf32>
    %2 = arith.addf %0, %1 : vector<1x8x128xf32>
    %c0_5 = arith.constant 0 : index
    %c0_6 = arith.constant 0 : index
    %c0_7 = arith.constant 0 : index
    %3 = vector.load %arg3[%c0_5, %c0_6, %c0_7] : memref<1x8x128xf32, #tpu.memory_space<vmem>>, vector<1x8x128xf32>
    tpu.vector_store %arg3[%c0_5, %c0_6, %c0_7], %2 {strides = array<i32>} : memref<1x8x128xf32, #tpu.memory_space<vmem>>, vector<1x8x128xf32>,
    return
  }
  func.func @transform_0(%arg0: i32) -> (i32, i32, i32) {
    %c0_i32 = arith.constant 0 : i32
    %c0_i32_0 = arith.constant 0 : i32
    %c0_i32_1 = arith.constant 0 : i32
    return %arg0, %c0_i32, %c0_i32_0 : i32, i32, i32
  }
  func.func @transform_1(%arg0: i32) -> (i32, i32, i32) {
    %c0_i32 = arith.constant 0 : i32
    %c0_i32_0 = arith.constant 0 : i32
    %c0_i32_1 = arith.constant 0 : i32
    %c0_i32_2 = arith.constant 0 : i32
    return %c0_i32, %c0_i32_0, %c0_i32_1 : i32, i32, i32
  }
  func.func @transform_2(%arg0: i32) -> (i32, i32, i32) {
    %c0_i32 = arith.constant 0 : i32
    %c0_i32_0 = arith.constant 0 : i32
    %c0_i32_1 = arith.constant 0 : i32
    return %arg0, %c0_i32, %c0_i32_0 : i32, i32, i32
  }
}

module attributes {stable_mosaic.version = 11 : i64} {
  func.func @_pe_add_kernel(%arg0: i32, %arg1: memref<1x8x128xf32, #tpu.memory_space<vmem>>, %arg2: memref<1x8x128xf32, #tpu.memory_space<vmem>>, %arg3: memref<1x8x128xf32, #tpu.memory_space<vmem>>) attributes {dimension_semantics = [#tpu.dimension_semantics<parallel>], iteration_bounds = array<i64: 2>, scalar_prefetch = 0 : i64, scratch_operands = 0 : i64, tpu.core_type = #tpu.core_type<tc>, window_params = [{transform_indices = @transform_0, window_bounds = array<i64: 1, 8, 128>}, {transform_indices = @transform_1, window_bounds = array<i64: 1, 8, 128>}, {transform_indices = @transform_2, window_bounds = array<i64: 1, 8, 128>}]} {
    %c0 = arith.constant 0 : index
    %c0_0 = arith.constant 0 : index
    %c0_1 = arith.constant 0 : index
    %0 = vector.load %arg1[%c0, %c0_0, %c0_1] : memref<1x8x128xf32, #tpu.memory_space<vmem>>, vector<1x8x128xf32>
    %c0_2 = arith.constant 0 : index
    %c0_3 = arith.constant 0 : index
    %c0_4 = arith.constant 0 : index
    %1 = vector.load %arg2[%c0_2, %c0_3, %c0_4] : memref<1x8x128xf32, #tpu.memory_space<vmem>>, vector<1x8x128xf32>
    %2 = arith.addf %0, %1 : vector<1x8x128xf32>
    %c0_5 = arith.constant 0 : index
    %c0_6 = arith.constant 0 : index
    %c0_7 = arith.constant 0 : index
    %3 = vector.load %arg3[%c0_5, %c0_6, %c0_7] : memref<1x8x128xf32, #tpu.memory_space<vmem>>, vector<1x8x128xf32>
    tpu.vector_store %arg3[%c0_5, %c0_6, %c0_7], %2 {strides = array<i32>} : memref<1x8x128xf32, #tpu.memory_space<vmem>>, vector<1x8x128xf32>,
    return
  }
  func.func @transform_0(%arg0: i32) -> (i32, i32, i32) {
    %c0_i32 = arith.constant 0 : i32
    %c0_i32_0 = arith.constant 0 : i32
    %c0_i32_1 = arith.constant 0 : i32
    return %arg0, %c0_i32, %c0_i32_0 : i32, i32, i32
  }
  func.func @transform_1(%arg0: i32) -> (i32, i32, i32) {
    %c0_i32 = arith.constant 0 : i32
    %c0_i32_0 = arith.constant 0 : i32
    %c0_i32_1 = arith.constant 0 : i32
    %c0_i32_2 = arith.constant 0 : i32
    return %c0_i32, %c0_i32_0, %c0_i32_1 : i32, i32, i32
  }
  func.func @transform_2(%arg0: i32) -> (i32, i32, i32) {
    %c0_i32 = arith.constant 0 : i32
    %c0_i32_0 = arith.constant 0 : i32
    %c0_i32_1 = arith.constant 0 : i32
    return %arg0, %c0_i32, %c0_i32_0 : i32, i32, i32
  }
}

</mosaic_0001>

<llo_original>
// kernel: tpu_custom_call.1
$region0: #{tpu_custom_call.1}
  #allocation0 [shape = 'u32[]', space=smem, size = 0x4, offset = 0x4, fixed_abs, tag = 'smem constant byte address 0x4 - core index']
  #allocation1 [shape = 'u32[144,128]{1,0:T(1,128)}', space=vmem, size = 0x12000, scoped, tag = 'internal scratch']
  %s0 = inlined_call_operand.hbm [shape: f32[2,2,128], index: 0, kind: input, shape index: {}]
  %s1 = inlined_call_operand.hbm [shape: f32[1,16,128], index: 1, kind: input, shape index: {}]
  %s2 = inlined_call_operand.hbm [shape: f32[2,2,128], index: 2, kind: output, shape index: {}]
  %s3 = sld [smem:[#allocation0]]
  $region49: #{tpu_custom_call.1} parent=0
    _
  %s5 = ssub.s32 1, %s3
  %s6 = scalar_select 0, %s5, %s3
  $region1: #{tpu_custom_call.1} parent=0
    #allocation2 [shape = 'u8[8192]{0}', space=vmem, size = 0x2000, scoped, tag = 'input window, operand 0']
    #allocation3 [shape = 's32[2]{0}', space=sflag, size = 0x8, scoped, tag = 'scoped memory for tpu_custom_call.1']
    #allocation4 [shape = 's32[2]{0}', space=sflag, size = 0x8, scoped, tag = 'scoped memory for tpu_custom_call.1']
    #allocation5 [shape = 'u8[4096]{0}', space=vmem, size = 0x1000, scoped, tag = 'input window, operand 1, single buffered']
    #allocation6 [shape = 's32[1]{0}', space=sflag, size = 0x4, scoped, tag = 'scoped memory for tpu_custom_call.1']
    #allocation7 [shape = 'u8[8192]{0}', space=vmem, size = 0x2000, scoped, tag = 'output window, operand 0']
    %7 = vsyncpa [#allocation3], 0
    %s8 = scalar_lea.sflag [#allocation3], 1
    %9 = vsyncpa %s8, 0
    %10 = vsyncpa [#allocation6], 0
    %11 = vsyncpa [#allocation4], 0
    %s12 = scalar_lea.sflag [#allocation4], 1
    %13 = vsyncpa %s12, 0
    loop: start=0, step=1, limit=4
    $region2: #{tpu_custom_call.1} parent=1 // loop_pre_header
      _
    $region3: #{tpu_custom_call.1} parent=1 // loop_header
      %s15 = sphi 0, %s19
      %p16 = scmp.ge.s32.totalorder %s15, 4
      %s25 = sphi 0, %s27
      %s28 = sphi 0, %s25
      %s29 = sphi 0, %s28
      %s45 = sphi 0, %s29
      %s49 = sphi 0, %s49
      %s51 = sphi 0, %s49
      %s52 = sphi 0, %s51
      %s66 = sphi 0, %s52
      %s72 = sphi 0, %s74
      %s75 = sphi 0, %s72
      %s76 = sphi 0, %s75
      %s92 = sphi 0, %s76
    $region4: #{tpu_custom_call.1} parent=1 // loop_header_branch
      %18 = sbr.rel (%p16) target = $region8
    $region5: #{tpu_custom_call.1} parent=1 // loop_body
      %s20 = ssub.s32 %s15, 1
      %s21 = ssub.s32 %s15, 2
      %s22 = sadd.s32 %s15, 1
      %s23 = ssub.s32 %s15, %s22
      %p24 = scmp.eq.s32.totalorder %s23, 0
      %s26 = sadd.s32 %s25, 1
      %s27 = scalar_select %p24, %s25, %s26
      %p30 = pneg %p24
      %p31 = scmp.eq.s32.totalorder %s15, 1
      %p32 = por %p30, %p31
      %p33 = scmp.ne.s32.totalorder %s25, %s28
      %p34 = scmp.eq.s32.totalorder %s15, 0
      %p35 = por %p33, %p34
      %p36 = scmp.ne.s32.totalorder %s25, %s28
      %p37 = scmp.eq.s32.totalorder %s20, 1
      %p38 = por %p36, %p37
      %p39 = scmp.ne.s32.totalorder %s28, %s29
      %p40 = scmp.eq.s32.totalorder %s20, 0
      %p41 = por %p39, %p40
      %p42 = scmp.ne.s32.totalorder %s28, %s29
      %p43 = scmp.eq.s32.totalorder %s21, 1
      %p44 = por %p42, %p43
      %p46 = scmp.ne.s32.totalorder %s29, %s45
      %p47 = scmp.eq.s32.totalorder %s21, 0
      %p48 = por %p46, %p47
      %s50 = sadd.s32 %s49, 1
      %p53 = scmp.eq.s32.totalorder %s15, 1
      %p54 = scmp.ne.s32.totalorder %s49, %s51
      %p55 = scmp.eq.s32.totalorder %s15, 0
      %p56 = por %p54, %p55
      %p57 = scmp.ne.s32.totalorder %s49, %s51
      %p58 = scmp.eq.s32.totalorder %s20, 1
      %p59 = por %p57, %p58
      %p60 = scmp.ne.s32.totalorder %s51, %s52
      %p61 = scmp.eq.s32.totalorder %s20, 0
      %p62 = por %p60, %p61
      %p63 = scmp.ne.s32.totalorder %s51, %s52
      %p64 = scmp.eq.s32.totalorder %s21, 1
      %p65 = por %p63, %p64
      %p67 = scmp.ne.s32.totalorder %s52, %s66
      %p68 = scmp.eq.s32.totalorder %s21, 0
      %p69 = por %p67, %p68
      %s70 = ssub.s32 %s15, %s22
      %p71 = scmp.eq.s32.totalorder %s70, 0
      %s73 = sadd.s32 %s72, 1
      %s74 = scalar_select %p71, %s72, %s73
      %p77 = pneg %p71
      %p78 = scmp.eq.s32.totalorder %s15, 1
      %p79 = por %p77, %p78
      %p80 = scmp.ne.s32.totalorder %s72, %s75
      %p81 = scmp.eq.s32.totalorder %s15, 0
      %p82 = por %p80, %p81
      %p83 = scmp.ne.s32.totalorder %s72, %s75
      %p84 = scmp.eq.s32.totalorder %s20, 1
      %p85 = por %p83, %p84
      %p86 = scmp.ne.s32.totalorder %s75, %s76
      %p87 = scmp.eq.s32.totalorder %s20, 0
      %p88 = por %p86, %p87
      %p89 = scmp.ne.s32.totalorder %s75, %s76
      %p90 = scmp.eq.s32.totalorder %s21, 1
      %p91 = por %p89, %p90
      %p93 = scmp.ne.s32.totalorder %s76, %s92
      %p94 = scmp.eq.s32.totalorder %s21, 0
      %p95 = por %p93, %p94
      %p96 = scmp.le.s32.totalorder 1, %s15
      %p97 = scmp.lt.s32.totalorder %s15, 3
      %p98 = pnand %p96, %p97
      %p99 = pneg %p98
      // Predicated region
      $region9: #{tpu_custom_call.1} parent=5 // pred_check
        _
      $region10: #{tpu_custom_call.1} parent=5 // pred_check_branch
        %101 = sbr.rel (%p98) target = $region12
      $region11: #{tpu_custom_call.1} parent=5 // pred_region
        %s102 = ssub.s32 %s15, 1
        // Predicated region
        $region13: #{tpu_custom_call.1} parent=11 // pred_check
          %p103 = pneg %p62
        $region14: #{tpu_custom_call.1} parent=11 // pred_check_branch
          %105 = sbr.rel (%p103) target = $region16
        $region15: #{tpu_custom_call.1} parent=11 // pred_region
          %s107 = ssub.s32 128, 128
          %108 = vsyncadd [#allocation6], %s107
          %s110 = sshll.u32 [#allocation5], 4
          %s111 = int_to_ptr.vmem [resolvable:$true] %s110
          %113 = dma.hbm_to_vmem [thread:$0]  %s1, 128, %s111, [#allocation6]
        $region16: #{tpu_custom_call.1} parent=11 // pred_fallthru
          _
      $region12: #{tpu_custom_call.1} parent=5 // pred_fallthru
        _
      %p114 = scmp.lt.s32.totalorder %s15, 2
      // Predicated region
      $region17: #{tpu_custom_call.1} parent=5 // pred_check
        %p115 = pneg %p114
      $region18: #{tpu_custom_call.1} parent=5 // pred_check_branch
        %117 = sbr.rel (%p115) target = $region20
      $region19: #{tpu_custom_call.1} parent=5 // pred_region
        // Predicated region
        $region21: #{tpu_custom_call.1} parent=19 // pred_check
          %p118 = pneg %p35
        $region22: #{tpu_custom_call.1} parent=19 // pred_check_branch
          %120 = sbr.rel (%p118) target = $region24
        $region23: #{tpu_custom_call.1} parent=19 // pred_region
          %s121 = sand.u32 %s25, 1
          %s122 = scalar_lea.sflag [#allocation3], %s121
          %s123 = sand.u32 %s25, 1
          %s124 = smul.addr %s123, 8
          %s125 = scalar_lea.vmem [#allocation2], %s124
          %s127 = ssub.s32 128, 32
          %128 = vsyncadd %s122, %s127
          %s129 = smul.addr %s15, 32
          %s130 = scalar_lea.hbm %s0, %s129
          %s131 = sshll.u32 %s125, 4
          %s132 = int_to_ptr.vmem [resolvable:$true] %s131
          %137 = dma.hbm_to_vmem [thread:$0]  %s130, 32, %s132, %s122, 32, 32, 2
        $region24: #{tpu_custom_call.1} parent=19 // pred_fallthru
          _
      $region20: #{tpu_custom_call.1} parent=5 // pred_fallthru
        _
      %p138 = scmp.le.s32.totalorder 1, %s15
      %p139 = scmp.lt.s32.totalorder %s15, 3
      %p140 = pnand %p138, %p139
      %p141 = pneg %p140
      // Predicated region
      $region25: #{tpu_custom_call.1} parent=5 // pred_check
        _
      $region26: #{tpu_custom_call.1} parent=5 // pred_check_branch
        %143 = sbr.rel (%p140) target = $region28
      $region27: #{tpu_custom_call.1} parent=5 // pred_region
        %s144 = ssub.s32 %s15, 1
        %s145 = sand.u32 %s28, 1
        %s146 = scalar_lea.sflag [#allocation3], %s145
        %s147 = sand.u32 %s28, 1
        %s148 = smul.addr %s147, 8
        %s149 = scalar_lea.vmem [#allocation2], %s148
        // Predicated region
        $region29: #{tpu_custom_call.1} parent=27 // pred_check
          %p150 = pneg %p41
        $region30: #{tpu_custom_call.1} parent=27 // pred_check_branch
          %152 = sbr.rel (%p150) target = $region32
        $region31: #{tpu_custom_call.1} parent=27 // pred_region
          %153 = dma.done %s146, 128
        $region32: #{tpu_custom_call.1} parent=27 // pred_fallthru
          _
        // Predicated region
        $region33: #{tpu_custom_call.1} parent=27 // pred_check
          %p154 = pneg %p62
        $region34: #{tpu_custom_call.1} parent=27 // pred_check_branch
          %156 = sbr.rel (%p154) target = $region36
        $region35: #{tpu_custom_call.1} parent=27 // pred_region
          %157 = dma.done [#allocation6], 128
        $region36: #{tpu_custom_call.1} parent=27 // pred_fallthru
          _
        %s158 = sand.u32 %s28, 1
        %s159 = scalar_lea.sflag [#allocation3], %s158
        %s160 = sand.u32 %s28, 1
        %s161 = smul.addr %s160, 8
        %s162 = scalar_lea.vmem [#allocation2], %s161
        %p163 = pneg %p41
        %p164 = pneg %p38
        %p165 = pneg %p62
        %p166 = pneg %p59
        %p167 = pneg %p88
        %p168 = pneg %p85
        %s169 = sand.u32 %s75, 1
        %s170 = scalar_lea.sflag [#allocation4], %s169
        %s171 = sand.u32 %s75, 1
        %s172 = smul.addr %s171, 8
        %s173 = scalar_lea.vmem [#allocation7], %s172
        %v174 = vld [vmem:[%s149] sm:$0xff]
        %v175 = vld [vmem:[#allocation5] sm:$0xff]
        %v176 = vadd.f32 %v174, %v175
        %177 = vst [vmem:[%s173] sm:$0xff] %v176
        %s178 = sand.u32 %s75, 1
        %s179 = scalar_lea.sflag [#allocation4], %s178
        %s180 = sand.u32 %s75, 1
        %s181 = smul.addr %s180, 8
        %s182 = scalar_lea.vmem [#allocation7], %s181
        // Predicated region
        $region37: #{tpu_custom_call.1} parent=27 // pred_check
          %p183 = pneg %p85
        $region38: #{tpu_custom_call.1} parent=27 // pred_check_branch
          %185 = sbr.rel (%p183) target = $region40
        $region39: #{tpu_custom_call.1} parent=27 // pred_region
          %s187 = ssub.s32 128, 32
          %188 = vsyncadd %s179, %s187
          %s189 = smul.addr %s20, 32
          %s190 = scalar_lea.hbm %s2, %s189
          %s191 = sshll.u32 %s182, 4
          %s192 = int_to_ptr.vmem [resolvable:$true] %s191
          %197 = dma.vmem_to_hbm [thread:$0]  %s192, 32, %s190, %s179, 32, 32, 2
        $region40: #{tpu_custom_call.1} parent=27 // pred_fallthru
          _
      $region28: #{tpu_custom_call.1} parent=5 // pred_fallthru
        _
      %p198 = scmp.le.s32.totalorder 2, %s15
      // Predicated region
      $region41: #{tpu_custom_call.1} parent=5 // pred_check
        %p199 = pneg %p198
      $region42: #{tpu_custom_call.1} parent=5 // pred_check_branch
        %201 = sbr.rel (%p199) target = $region44
      $region43: #{tpu_custom_call.1} parent=5 // pred_region
        %s202 = ssub.s32 %s15, 2
        // Predicated region
        $region45: #{tpu_custom_call.1} parent=43 // pred_check
          %p203 = pneg %p91
        $region46: #{tpu_custom_call.1} parent=43 // pred_check_branch
          %205 = sbr.rel (%p203) target = $region48
        $region47: #{tpu_custom_call.1} parent=43 // pred_region
          %s206 = sand.u32 %s76, 1
          %s207 = scalar_lea.sflag [#allocation4], %s206
          %s208 = sand.u32 %s76, 1
          %s209 = smul.addr %s208, 8
          %s210 = scalar_lea.vmem [#allocation7], %s209
          %211 = dma.done %s207, 128
        $region48: #{tpu_custom_call.1} parent=43 // pred_fallthru
          _
      $region44: #{tpu_custom_call.1} parent=5 // pred_fallthru
        _
    $region6: #{tpu_custom_call.1} parent=1 // loop_footer
      %s19 = sadd.s32 1, %s15
    $region7: #{tpu_custom_call.1} parent=1 // loop_footer_branch
      %14 = sbr.rel target = $region3
    $region8: #{tpu_custom_call.1} parent=1 // loop_exit
      _
    %212 = vsyncpa [#allocation3], 1
    %s213 = scalar_lea.sflag [#allocation3], 1
    %214 = vsyncpa %s213, 1
    %215 = vsyncpa [#allocation6], 1
    %216 = vsyncpa [#allocation4], 1
    %s217 = scalar_lea.sflag [#allocation4], 1
    %218 = vsyncpa %s217, 1

// kernel: tpu_custom_call.1
$region0: #{tpu_custom_call.1}
  #allocation0 [shape = 'u32[]', space=smem, size = 0x4, offset = 0x4, fixed_abs, tag = 'smem constant byte address 0x4 - core index']
  #allocation1 [shape = 'u32[144,128]{1,0:T(1,128)}', space=vmem, size = 0x12000, scoped, tag = 'internal scratch']
  %s0 = inlined_call_operand.hbm [shape: f32[2,2,128], index: 0, kind: input, shape index: {}]
  %s1 = inlined_call_operand.hbm [shape: f32[1,16,128], index: 1, kind: input, shape index: {}]
  %s2 = inlined_call_operand.hbm [shape: f32[2,2,128], index: 2, kind: output, shape index: {}]
  %s3 = sld [smem:[#allocation0]]
  $region49: #{tpu_custom_call.1} parent=0
    _
  %s5 = ssub.s32 1, %s3
  %s6 = scalar_select 0, %s5, %s3
  $region1: #{tpu_custom_call.1} parent=0
    #allocation2 [shape = 'u8[8192]{0}', space=vmem, size = 0x2000, scoped, tag = 'input window, operand 0']
    #allocation3 [shape = 's32[2]{0}', space=sflag, size = 0x8, scoped, tag = 'scoped memory for tpu_custom_call.1']
    #allocation4 [shape = 's32[2]{0}', space=sflag, size = 0x8, scoped, tag = 'scoped memory for tpu_custom_call.1']
    #allocation5 [shape = 'u8[4096]{0}', space=vmem, size = 0x1000, scoped, tag = 'input window, operand 1, single buffered']
    #allocation6 [shape = 's32[1]{0}', space=sflag, size = 0x4, scoped, tag = 'scoped memory for tpu_custom_call.1']
    #allocation7 [shape = 'u8[8192]{0}', space=vmem, size = 0x2000, scoped, tag = 'output window, operand 0']
    %7 = vsyncpa [#allocation3], 0
    %s8 = scalar_lea.sflag [#allocation3], 1
    %9 = vsyncpa %s8, 0
    %10 = vsyncpa [#allocation6], 0
    %11 = vsyncpa [#allocation4], 0
    %s12 = scalar_lea.sflag [#allocation4], 1
    %13 = vsyncpa %s12, 0
    loop: start=0, step=1, limit=4
    $region2: #{tpu_custom_call.1} parent=1 // loop_pre_header
      _
    $region3: #{tpu_custom_call.1} parent=1 // loop_header
      %s15 = sphi 0, %s19
      %p16 = scmp.ge.s32.totalorder %s15, 4
      %s25 = sphi 0, %s27
      %s28 = sphi 0, %s25
      %s29 = sphi 0, %s28
      %s45 = sphi 0, %s29
      %s49 = sphi 0, %s49
      %s51 = sphi 0, %s49
      %s52 = sphi 0, %s51
      %s66 = sphi 0, %s52
      %s72 = sphi 0, %s74
      %s75 = sphi 0, %s72
      %s76 = sphi 0, %s75
      %s92 = sphi 0, %s76
    $region4: #{tpu_custom_call.1} parent=1 // loop_header_branch
      %18 = sbr.rel (%p16) target = $region8
    $region5: #{tpu_custom_call.1} parent=1 // loop_body
      %s20 = ssub.s32 %s15, 1
      %s21 = ssub.s32 %s15, 2
      %s22 = sadd.s32 %s15, 1
      %s23 = ssub.s32 %s15, %s22
      %p24 = scmp.eq.s32.totalorder %s23, 0
      %s26 = sadd.s32 %s25, 1
      %s27 = scalar_select %p24, %s25, %s26
      %p30 = pneg %p24
      %p31 = scmp.eq.s32.totalorder %s15, 1
      %p32 = por %p30, %p31
      %p33 = scmp.ne.s32.totalorder %s25, %s28
      %p34 = scmp.eq.s32.totalorder %s15, 0
      %p35 = por %p33, %p34
      %p36 = scmp.ne.s32.totalorder %s25, %s28
      %p37 = scmp.eq.s32.totalorder %s20, 1
      %p38 = por %p36, %p37
      %p39 = scmp.ne.s32.totalorder %s28, %s29
      %p40 = scmp.eq.s32.totalorder %s20, 0
      %p41 = por %p39, %p40
      %p42 = scmp.ne.s32.totalorder %s28, %s29
      %p43 = scmp.eq.s32.totalorder %s21, 1
      %p44 = por %p42, %p43
      %p46 = scmp.ne.s32.totalorder %s29, %s45
      %p47 = scmp.eq.s32.totalorder %s21, 0
      %p48 = por %p46, %p47
      %s50 = sadd.s32 %s49, 1
      %p53 = scmp.eq.s32.totalorder %s15, 1
      %p54 = scmp.ne.s32.totalorder %s49, %s51
      %p55 = scmp.eq.s32.totalorder %s15, 0
      %p56 = por %p54, %p55
      %p57 = scmp.ne.s32.totalorder %s49, %s51
      %p58 = scmp.eq.s32.totalorder %s20, 1
      %p59 = por %p57, %p58
      %p60 = scmp.ne.s32.totalorder %s51, %s52
      %p61 = scmp.eq.s32.totalorder %s20, 0
      %p62 = por %p60, %p61
      %p63 = scmp.ne.s32.totalorder %s51, %s52
      %p64 = scmp.eq.s32.totalorder %s21, 1
      %p65 = por %p63, %p64
      %p67 = scmp.ne.s32.totalorder %s52, %s66
      %p68 = scmp.eq.s32.totalorder %s21, 0
      %p69 = por %p67, %p68
      %s70 = ssub.s32 %s15, %s22
      %p71 = scmp.eq.s32.totalorder %s70, 0
      %s73 = sadd.s32 %s72, 1
      %s74 = scalar_select %p71, %s72, %s73
      %p77 = pneg %p71
      %p78 = scmp.eq.s32.totalorder %s15, 1
      %p79 = por %p77, %p78
      %p80 = scmp.ne.s32.totalorder %s72, %s75
      %p81 = scmp.eq.s32.totalorder %s15, 0
      %p82 = por %p80, %p81
      %p83 = scmp.ne.s32.totalorder %s72, %s75
      %p84 = scmp.eq.s32.totalorder %s20, 1
      %p85 = por %p83, %p84
      %p86 = scmp.ne.s32.totalorder %s75, %s76
      %p87 = scmp.eq.s32.totalorder %s20, 0
      %p88 = por %p86, %p87
      %p89 = scmp.ne.s32.totalorder %s75, %s76
      %p90 = scmp.eq.s32.totalorder %s21, 1
      %p91 = por %p89, %p90
      %p93 = scmp.ne.s32.totalorder %s76, %s92
      %p94 = scmp.eq.s32.totalorder %s21, 0
      %p95 = por %p93, %p94
      %p96 = scmp.le.s32.totalorder 1, %s15
      %p97 = scmp.lt.s32.totalorder %s15, 3
      %p98 = pnand %p96, %p97
      %p99 = pneg %p98
      // Predicated region
      $region9: #{tpu_custom_call.1} parent=5 // pred_check
        _
      $region10: #{tpu_custom_call.1} parent=5 // pred_check_branch
        %101 = sbr.rel (%p98) target = $region12
      $region11: #{tpu_custom_call.1} parent=5 // pred_region
        %s102 = ssub.s32 %s15, 1
        // Predicated region
        $region13: #{tpu_custom_call.1} parent=11 // pred_check
          %p103 = pneg %p62
        $region14: #{tpu_custom_call.1} parent=11 // pred_check_branch
          %105 = sbr.rel (%p103) target = $region16
        $region15: #{tpu_custom_call.1} parent=11 // pred_region
          %s107 = ssub.s32 128, 128
          %108 = vsyncadd [#allocation6], %s107
          %s110 = sshll.u32 [#allocation5], 4
          %s111 = int_to_ptr.vmem [resolvable:$true] %s110
          %113 = dma.hbm_to_vmem [thread:$0]  %s1, 128, %s111, [#allocation6]
        $region16: #{tpu_custom_call.1} parent=11 // pred_fallthru
          _
      $region12: #{tpu_custom_call.1} parent=5 // pred_fallthru
        _
      %p114 = scmp.lt.s32.totalorder %s15, 2
      // Predicated region
      $region17: #{tpu_custom_call.1} parent=5 // pred_check
        %p115 = pneg %p114
      $region18: #{tpu_custom_call.1} parent=5 // pred_check_branch
        %117 = sbr.rel (%p115) target = $region20
      $region19: #{tpu_custom_call.1} parent=5 // pred_region
        // Predicated region
        $region21: #{tpu_custom_call.1} parent=19 // pred_check
          %p118 = pneg %p35
        $region22: #{tpu_custom_call.1} parent=19 // pred_check_branch
          %120 = sbr.rel (%p118) target = $region24
        $region23: #{tpu_custom_call.1} parent=19 // pred_region
          %s121 = sand.u32 %s25, 1
          %s122 = scalar_lea.sflag [#allocation3], %s121
          %s123 = sand.u32 %s25, 1
          %s124 = smul.addr %s123, 8
          %s125 = scalar_lea.vmem [#allocation2], %s124
          %s127 = ssub.s32 128, 32
          %128 = vsyncadd %s122, %s127
          %s129 = smul.addr %s15, 32
          %s130 = scalar_lea.hbm %s0, %s129
          %s131 = sshll.u32 %s125, 4
          %s132 = int_to_ptr.vmem [resolvable:$true] %s131
          %137 = dma.hbm_to_vmem [thread:$0]  %s130, 32, %s132, %s122, 32, 32, 2
        $region24: #{tpu_custom_call.1} parent=19 // pred_fallthru
          _
      $region20: #{tpu_custom_call.1} parent=5 // pred_fallthru
        _
      %p138 = scmp.le.s32.totalorder 1, %s15
      %p139 = scmp.lt.s32.totalorder %s15, 3
      %p140 = pnand %p138, %p139
      %p141 = pneg %p140
      // Predicated region
      $region25: #{tpu_custom_call.1} parent=5 // pred_check
        _
      $region26: #{tpu_custom_call.1} parent=5 // pred_check_branch
        %143 = sbr.rel (%p140) target = $region28
      $region27: #{tpu_custom_call.1} parent=5 // pred_region
        %s144 = ssub.s32 %s15, 1
        %s145 = sand.u32 %s28, 1
        %s146 = scalar_lea.sflag [#allocation3], %s145
        %s147 = sand.u32 %s28, 1
        %s148 = smul.addr %s147, 8
        %s149 = scalar_lea.vmem [#allocation2], %s148
        // Predicated region
        $region29: #{tpu_custom_call.1} parent=27 // pred_check
          %p150 = pneg %p41
        $region30: #{tpu_custom_call.1} parent=27 // pred_check_branch
          %152 = sbr.rel (%p150) target = $region32
        $region31: #{tpu_custom_call.1} parent=27 // pred_region
          %153 = dma.done %s146, 128
        $region32: #{tpu_custom_call.1} parent=27 // pred_fallthru
          _
        // Predicated region
        $region33: #{tpu_custom_call.1} parent=27 // pred_check
          %p154 = pneg %p62
        $region34: #{tpu_custom_call.1} parent=27 // pred_check_branch
          %156 = sbr.rel (%p154) target = $region36
        $region35: #{tpu_custom_call.1} parent=27 // pred_region
          %157 = dma.done [#allocation6], 128
        $region36: #{tpu_custom_call.1} parent=27 // pred_fallthru
          _
        %s158 = sand.u32 %s28, 1
        %s159 = scalar_lea.sflag [#allocation3], %s158
        %s160 = sand.u32 %s28, 1
        %s161 = smul.addr %s160, 8
        %s162 = scalar_lea.vmem [#allocation2], %s161
        %p163 = pneg %p41
        %p164 = pneg %p38
        %p165 = pneg %p62
        %p166 = pneg %p59
        %p167 = pneg %p88
        %p168 = pneg %p85
        %s169 = sand.u32 %s75, 1
        %s170 = scalar_lea.sflag [#allocation4], %s169
        %s171 = sand.u32 %s75, 1
        %s172 = smul.addr %s171, 8
        %s173 = scalar_lea.vmem [#allocation7], %s172
        %v174 = vld [vmem:[%s149] sm:$0xff]
        %v175 = vld [vmem:[#allocation5] sm:$0xff]
        %v176 = vadd.f32 %v174, %v175
        %177 = vst [vmem:[%s173] sm:$0xff] %v176
        %s178 = sand.u32 %s75, 1
        %s179 = scalar_lea.sflag [#allocation4], %s178
        %s180 = sand.u32 %s75, 1
        %s181 = smul.addr %s180, 8
        %s182 = scalar_lea.vmem [#allocation7], %s181
        // Predicated region
        $region37: #{tpu_custom_call.1} parent=27 // pred_check
          %p183 = pneg %p85
        $region38: #{tpu_custom_call.1} parent=27 // pred_check_branch
          %185 = sbr.rel (%p183) target = $region40
        $region39: #{tpu_custom_call.1} parent=27 // pred_region
          %s187 = ssub.s32 128, 32
          %188 = vsyncadd %s179, %s187
          %s189 = smul.addr %s20, 32
          %s190 = scalar_lea.hbm %s2, %s189
          %s191 = sshll.u32 %s182, 4
          %s192 = int_to_ptr.vmem [resolvable:$true] %s191
          %197 = dma.vmem_to_hbm [thread:$0]  %s192, 32, %s190, %s179, 32, 32, 2
        $region40: #{tpu_custom_call.1} parent=27 // pred_fallthru
          _
      $region28: #{tpu_custom_call.1} parent=5 // pred_fallthru
        _
      %p198 = scmp.le.s32.totalorder 2, %s15
      // Predicated region
      $region41: #{tpu_custom_call.1} parent=5 // pred_check
        %p199 = pneg %p198
      $region42: #{tpu_custom_call.1} parent=5 // pred_check_branch
        %201 = sbr.rel (%p199) target = $region44
      $region43: #{tpu_custom_call.1} parent=5 // pred_region
        %s202 = ssub.s32 %s15, 2
        // Predicated region
        $region45: #{tpu_custom_call.1} parent=43 // pred_check
          %p203 = pneg %p91
        $region46: #{tpu_custom_call.1} parent=43 // pred_check_branch
          %205 = sbr.rel (%p203) target = $region48
        $region47: #{tpu_custom_call.1} parent=43 // pred_region
          %s206 = sand.u32 %s76, 1
          %s207 = scalar_lea.sflag [#allocation4], %s206
          %s208 = sand.u32 %s76, 1
          %s209 = smul.addr %s208, 8
          %s210 = scalar_lea.vmem [#allocation7], %s209
          %211 = dma.done %s207, 128
        $region48: #{tpu_custom_call.1} parent=43 // pred_fallthru
          _
      $region44: #{tpu_custom_call.1} parent=5 // pred_fallthru
        _
    $region6: #{tpu_custom_call.1} parent=1 // loop_footer
      %s19 = sadd.s32 1, %s15
    $region7: #{tpu_custom_call.1} parent=1 // loop_footer_branch
      %14 = sbr.rel target = $region3
    $region8: #{tpu_custom_call.1} parent=1 // loop_exit
      _
    %212 = vsyncpa [#allocation3], 1
    %s213 = scalar_lea.sflag [#allocation3], 1
    %214 = vsyncpa %s213, 1
    %215 = vsyncpa [#allocation6], 1
    %216 = vsyncpa [#allocation4], 1
    %s217 = scalar_lea.sflag [#allocation4], 1
    %218 = vsyncpa %s217, 1

</llo_original>
